<compile_context>
chip_gen: v7x
topology: tpu7x:2x2x1
jax: 0.10.0
libtpu: 0.0.40
codegen_flags: <defaults>
</compile_context>

<pallas_src>
import math
from functools import partial

import jax
import jax.numpy as jnp
from jax import lax
from jax.experimental import pallas as pl
from jax.experimental.pallas import tpu as pltpu


# ---------------------------------------------------------------------------
# Model dimensions / helpers
# ---------------------------------------------------------------------------
IN_DIM = 17          # state features
IN_PAD = 32          # padded feature dim (64-byte bf16 rows)
HID = 128            # hidden width
N_ACT = 9            # number of actions (advantage width)
OUT_PAD = 128        # lane-dense fused-head width

_INV_SQRT2 = 0.7071067811865476
_SQRT_2_OVER_PI = 0.7978845608028654


def _round_up(n, m):
    return ((n + m - 1) // m) * m


def _gelu(z, approx):
    if approx:
        # tanh approximation -> EUP (own VLIW slot, overlaps MXU/VPU work).
        return 0.5 * z * (1.0 + jnp.tanh(
            jnp.float32(_SQRT_2_OVER_PI) * (z + 0.044715 * z * z * z)))
    # PyTorch F.gelu default (approximate='none'): 0.5*z*(1+erf(z/sqrt(2)))
    return 0.5 * z * (1.0 + lax.erf(z * jnp.float32(_INV_SQRT2)))


# ---------------------------------------------------------------------------
# Kernel
# ---------------------------------------------------------------------------
def _dqn_tile_kernel(x_ref, wf_ref, bf_ref, wh_ref, bh_ref, wo_ref, bo_ref,
                     out_ref, *, batch, tile_rows, fuse_mean, approx):
    """Per-batch-tile forward pass with a single lane-dense output store."""
    # feature = gelu(Linear(17->128)); bf16 MXU operands, f32 accumulation.
    h = _gelu(jnp.dot(x_ref[...], wf_ref[...],
                      preferred_element_type=jnp.float32) + bf_ref[...], approx)

    # Fused hidden layer [a1 | v1] as one Linear(128->256), one GELU.
    g = _gelu(jnp.dot(h.astype(jnp.bfloat16), wh_ref[...],
                      preferred_element_type=jnp.float32) + bh_ref[...], approx)

    # Fused block-diagonal head, zero-padded to 128 output columns:
    #   cols 0..8 = advantage, col 9 = value, cols 10..127 = 0.
    qh = jnp.dot(g.astype(jnp.bfloat16), wo_ref[...],
                 preferred_element_type=jnp.float32) + bo_ref[...]   # (TB, 128)

    if fuse_mean:
        # Whole batch lives in this single tile (the act() path): finish the
        # dueling combine in-kernel.  Rows >= batch are padding -> masked out.
        adv = qh[:, 0:N_ACT]
        val = qh[:, N_ACT:N_ACT + 1]
        rows = lax.broadcasted_iota(jnp.int32, (tile_rows, N_ACT), 0)
        adv_sum = jnp.sum(jnp.where(rows < batch, adv, 0.0))
        mean = adv_sum * jnp.float32(1.0 / (batch * N_ACT))
        # Lane-dense store: cols 0..8 carry q = val + adv - mean; the rest is
        # garbage that the wrapper slices off.
        out_ref[...] = qh + val - mean
    else:
        # Lane-dense store of the raw fused-head output; the global-mean
        # dueling combine is a tiny fused XLA epilogue in the wrapper.
        out_ref[...] = qh


# ---------------------------------------------------------------------------
# Wrapper
# ---------------------------------------------------------------------------
def dqn_forward(x, packed, *, tb=1024, approx_gelu=False):
    """x: (B, 17) float32.  packed: see pack_params().  Returns (B, 9) float32."""
    B, in_dim = x.shape
    assert in_dim == IN_DIM

    # Pad features 17 -> 32 and cast to bf16 once in the wrapper.
    x = jnp.pad(x, ((0, 0), (0, IN_PAD - in_dim))).astype(jnp.bfloat16)

    # Batch tile: multiple of 16 (bf16 sublane packing).  Cap so NT >= 2 once
    # B > 16 -> the ("parallel",) grid axis can shard across both v7x cores.
    tb = max(16, _round_up(tb, 16))
    if B > 16:
        TB = min(tb, _round_up(pl.cdiv(B, 2), 16))
    else:
        TB = 16
    B_pad = _round_up(B, TB)
    if B_pad != B:
        x = jnp.pad(x, ((0, B_pad - B), (0, 0)))
    NT = B_pad // TB
    fuse_mean = (NT == 1)

    resident = lambda shape: pl.BlockSpec(shape, lambda i: (0, 0))

    slab = pl.pallas_call(
        partial(_dqn_tile_kernel, batch=B, tile_rows=TB,
                fuse_mean=fuse_mean, approx=approx_gelu),
        grid=(NT,),
        in_specs=[
            pl.BlockSpec((TB, IN_PAD), lambda i: (i, 0)),   # x tile (bf16)
            resident((IN_PAD, HID)),                        # wf  (bf16)
            resident((1, HID)),                             # bf  (f32)
            resident((HID, 2 * HID)),                       # w_hid (bf16)
            resident((1, 2 * HID)),                         # b_hid (f32)
            resident((2 * HID, OUT_PAD)),                   # w_out (bf16)
            resident((1, OUT_PAD)),                         # b_out (f32)
        ],
        out_specs=pl.BlockSpec((TB, OUT_PAD), lambda i: (i, 0)),
        out_shape=jax.ShapeDtypeStruct((B_pad, OUT_PAD), jnp.float32),
        compiler_params=pltpu.CompilerParams(dimension_semantics=("parallel",)),
    )(x, packed["wf"], packed["bf"], packed["w_hid"], packed["b_hid"],
      packed["w_out"], packed["b_out"])

    if fuse_mean:
        return slab[:B, :N_ACT]

    # Global advantage.mean() over (batch, actions), exactly as the PyTorch
    # module does.  Tiny fused XLA epilogue: one (B, 9) reduce + elementwise.
    adv = slab[:B, :N_ACT]
    val = slab[:B, N_ACT:N_ACT + 1]
    return val + adv - jnp.mean(adv)


# ---------------------------------------------------------------------------
# Parameter init (PyTorch nn.Linear default: U(-1/sqrt(fan_in), 1/sqrt(fan_in)))
# and packing into the fused / padded / bf16 layout the kernel expects.
# ---------------------------------------------------------------------------
def init_linear(key, fan_in, fan_out):
    kw, kb = jax.random.split(key)
    bound = 1.0 / math.sqrt(fan_in)
    w = jax.random.uniform(kw, (fan_in, fan_out), jnp.float32, -bound, bound)
    b = jax.random.uniform(kb, (1, fan_out), jnp.float32, -bound, bound)
    return w, b


def init_params(key):
    keys = jax.random.split(key, 5)
    wf, bf = init_linear(keys[0], IN_DIM, HID)
    wa1, ba1 = init_linear(keys[1], HID, HID)
    wa2, ba2 = init_linear(keys[2], HID, N_ACT)
    wv1, bv1 = init_linear(keys[3], HID, HID)
    wv2, bv2 = init_linear(keys[4], HID, 1)
    return dict(wf=wf, bf=bf, wa1=wa1, ba1=ba1, wa2=wa2, ba2=ba2,
                wv1=wv1, bv1=bv1, wv2=wv2, bv2=bv2)


def pack_params(p):
    bf16 = jnp.bfloat16
    # Feature layer, zero-padded on the input dim 17 -> 32.
    wf = jnp.zeros((IN_PAD, HID), jnp.float32).at[:IN_DIM].set(p["wf"])
    # Fused hidden layer [a1 | v1].
    w_hid = jnp.concatenate([p["wa1"], p["wv1"]], axis=1)        # (128, 256)
    b_hid = jnp.concatenate([p["ba1"], p["bv1"]], axis=1)        # (1, 256)
    # Fused block-diagonal head, zero-padded to 128 output lanes.
    w_out = jnp.zeros((2 * HID, OUT_PAD), jnp.float32)
    w_out = w_out.at[:HID, 0:N_ACT].set(p["wa2"])                # adv head
    w_out = w_out.at[HID:, N_ACT:N_ACT + 1].set(p["wv2"])        # val head
    b_out = jnp.zeros((1, OUT_PAD), jnp.float32)
    b_out = b_out.at[0, 0:N_ACT].set(p["ba2"][0])
    b_out = b_out.at[0, N_ACT].set(p["bv2"][0, 0])
    return dict(
        wf=wf.astype(bf16), bf=p["bf"],
        w_hid=w_hid.astype(bf16), b_hid=b_hid,
        w_out=w_out.astype(bf16), b_out=b_out,
    )


# ---------------------------------------------------------------------------
# References
# ---------------------------------------------------------------------------
def dqn_forward_ref_f32(x, p):
    """Pure-f32, unfused reference (matches the PyTorch module exactly)."""
    h = _gelu(x @ p["wf"] + p["bf"], False)
    a = _gelu(h @ p["wa1"] + p["ba1"], False)
    adv = a @ p["wa2"] + p["ba2"]
    v = _gelu(h @ p["wv1"] + p["bv1"], False)
    val = v @ p["wv2"] + p["bv2"]
    return val + adv - jnp.mean(adv)


def dqn_forward_ref_bf16(x, packed):
    """Reference using the same fused/padded bf16-operand, f32-accumulate math."""
    bf16 = jnp.bfloat16
    xp = jnp.pad(x, ((0, 0), (0, IN_PAD - x.shape[1]))).astype(bf16)
    h = _gelu(jnp.dot(xp, packed["wf"],
                      preferred_element_type=jnp.float32) + packed["bf"], False)
    g = _gelu(jnp.dot(h.astype(bf16), packed["w_hid"],
                      preferred_element_type=jnp.float32) + packed["b_hid"], False)
    qh = jnp.dot(g.astype(bf16), packed["w_out"],
                 preferred_element_type=jnp.float32) + packed["b_out"]
    adv = qh[:, :N_ACT]
    val = qh[:, N_ACT:N_ACT + 1]
    return val + adv - jnp.mean(adv)


# ---------------------------------------------------------------------------
# Self-test
# ---------------------------------------------------------------------------
if __name__ == "__main__":
    key = jax.random.PRNGKey(0)
    k_params, k_x1, k_x2 = jax.random.split(key, 3)
    params = init_params(k_params)
    packed = pack_params(params)

    # Small batch (the DQN.act path): single tile, mean fused in-kernel.
    x_small = jax.random.normal(k_x1, (2, IN_DIM), jnp.float32)
    out_small = jax.block_until_ready(dqn_forward(x_small, packed))
    assert out_small.shape == (2, N_ACT)
    assert jnp.allclose(out_small, dqn_forward_ref_bf16(x_small, packed),
                        atol=5e-3, rtol=5e-3), "bf16 ref mismatch (small)"
    assert jnp.allclose(out_small, dqn_forward_ref_f32(x_small, params),
                        atol=5e-2, rtol=5e-2), "f32 ref mismatch (small)"

    # Larger, non-tile-multiple batch: multi-tile grid (NT >= 2), resident
    # weights, lane-dense streamed output, XLA epilogue for the global mean.
    x_big = jax.random.normal(k_x2, (1000, IN_DIM), jnp.float32)
    out_big = jax.block_until_ready(dqn_forward(x_big, packed, tb=512))
    assert out_big.shape == (1000, N_ACT)
    assert jnp.allclose(out_big, dqn_forward_ref_bf16(x_big, packed),
                        atol=5e-3, rtol=5e-3), "bf16 ref mismatch (large)"

    print("KERNEL_OK")
</pallas_src>

<mosaic_0001>
module attributes {stable_mosaic.version = 11 : i64} {
  func.func @_dqn_tile_kernel(%arg0: i32, %arg1: memref<16x32xbf16, #tpu.memory_space<vmem>>, %arg2: memref<32x128xbf16, #tpu.memory_space<vmem>>, %arg3: memref<1x128xf32, #tpu.memory_space<vmem>>, %arg4: memref<128x256xbf16, #tpu.memory_space<vmem>>, %arg5: memref<1x256xf32, #tpu.memory_space<vmem>>, %arg6: memref<256x128xbf16, #tpu.memory_space<vmem>>, %arg7: memref<1x128xf32, #tpu.memory_space<vmem>>, %arg8: memref<16x128xf32, #tpu.memory_space<vmem>>) attributes {dimension_semantics = [#tpu.dimension_semantics<parallel>], iteration_bounds = array<i64: 1>, scalar_prefetch = 0 : i64, scratch_operands = 0 : i64, tpu.core_type = #tpu.core_type<tc>, window_params = [{transform_indices = @transform_0, window_bounds = array<i64: 16, 32>}, {pipeline_mode = #tpu.pipeline_mode<synchronous>, transform_indices = @transform_1, window_bounds = array<i64: 32, 128>}, {pipeline_mode = #tpu.pipeline_mode<synchronous>, transform_indices = @transform_2, window_bounds = array<i64: 1, 128>}, {pipeline_mode = #tpu.pipeline_mode<synchronous>, transform_indices = @transform_3, window_bounds = array<i64: 128, 256>}, {pipeline_mode = #tpu.pipeline_mode<synchronous>, transform_indices = @transform_4, window_bounds = array<i64: 1, 256>}, {pipeline_mode = #tpu.pipeline_mode<synchronous>, transform_indices = @transform_5, window_bounds = array<i64: 256, 128>}, {pipeline_mode = #tpu.pipeline_mode<synchronous>, transform_indices = @transform_6, window_bounds = array<i64: 1, 128>}, {transform_indices = @transform_7, window_bounds = array<i64: 16, 128>}]} {
    %c0 = arith.constant 0 : index
    %c0_0 = arith.constant 0 : index
    %0 = vector.load %arg1[%c0, %c0_0] : memref<16x32xbf16, #tpu.memory_space<vmem>>, vector<16x32xbf16>
    %c0_1 = arith.constant 0 : index
    %c0_2 = arith.constant 0 : index
    %1 = vector.load %arg2[%c0_1, %c0_2] : memref<32x128xbf16, #tpu.memory_space<vmem>>, vector<32x128xbf16>
    %cst = arith.constant dense<0.000000e+00> : vector<16x128xf32>
    %2 = tpu.matmul %0, %1, %cst {dimension_numbers = #tpu.dot_dimension_numbers<[1], [0], [0], [1], [0, 0, 1, 1], [], []>} : vector<16x32xbf16>, vector<32x128xbf16>, vector<16x128xf32> -> vector<16x128xf32>
    %c0_3 = arith.constant 0 : index
    %c0_4 = arith.constant 0 : index
    %3 = vector.load %arg3[%c0_3, %c0_4] : memref<1x128xf32, #tpu.memory_space<vmem>>, vector<1x128xf32>
    %4 = vector.broadcast %3 : vector<1x128xf32> to vector<16x128xf32>
    %5 = arith.addf %2, %4 : vector<16x128xf32>
    %cst_5 = arith.constant 5.000000e-01 : f32
    %6 = vector.broadcast %cst_5 : f32 to vector<16x128xf32>
    %7 = arith.mulf %6, %5 : vector<16x128xf32>
    %cst_6 = arith.constant 0.707106769 : f32
    %8 = vector.broadcast %cst_6 : f32 to vector<16x128xf32>
    %9 = arith.mulf %5, %8 : vector<16x128xf32>
    %10 = math.erf %9 : vector<16x128xf32>
    %cst_7 = arith.constant 1.000000e+00 : f32
    %11 = vector.broadcast %cst_7 : f32 to vector<16x128xf32>
    %12 = arith.addf %11, %10 : vector<16x128xf32>
    %13 = arith.mulf %7, %12 : vector<16x128xf32>
    %14 = arith.truncf %13 : vector<16x128xf32> to vector<16x128xbf16>
    %c0_8 = arith.constant 0 : index
    %c0_9 = arith.constant 0 : index
    %15 = vector.load %arg4[%c0_8, %c0_9] : memref<128x256xbf16, #tpu.memory_space<vmem>>, vector<128x256xbf16>
    %cst_10 = arith.constant dense<0.000000e+00> : vector<16x256xf32>
    %16 = tpu.matmul %14, %15, %cst_10 {dimension_numbers = #tpu.dot_dimension_numbers<[1], [0], [0], [1], [0, 0, 1, 1], [], []>} : vector<16x128xbf16>, vector<128x256xbf16>, vector<16x256xf32> -> vector<16x256xf32>
    %c0_11 = arith.constant 0 : index
    %c0_12 = arith.constant 0 : index
    %17 = vector.load %arg5[%c0_11, %c0_12] : memref<1x256xf32, #tpu.memory_space<vmem>>, vector<1x256xf32>
    %18 = vector.broadcast %17 : vector<1x256xf32> to vector<16x256xf32>
    %19 = arith.addf %16, %18 : vector<16x256xf32>
    %cst_13 = arith.constant 5.000000e-01 : f32
    %20 = vector.broadcast %cst_13 : f32 to vector<16x256xf32>
    %21 = arith.mulf %20, %19 : vector<16x256xf32>
    %cst_14 = arith.constant 0.707106769 : f32
    %22 = vector.broadcast %cst_14 : f32 to vector<16x256xf32>
    %23 = arith.mulf %19, %22 : vector<16x256xf32>
    %24 = math.erf %23 : vector<16x256xf32>
    %cst_15 = arith.constant 1.000000e+00 : f32
    %25 = vector.broadcast %cst_15 : f32 to vector<16x256xf32>
    %26 = arith.addf %25, %24 : vector<16x256xf32>
    %27 = arith.mulf %21, %26 : vector<16x256xf32>
    %28 = arith.truncf %27 : vector<16x256xf32> to vector<16x256xbf16>
    %c0_16 = arith.constant 0 : index
    %c0_17 = arith.constant 0 : index
    %29 = vector.load %arg6[%c0_16, %c0_17] : memref<256x128xbf16, #tpu.memory_space<vmem>>, vector<256x128xbf16>
    %cst_18 = arith.constant dense<0.000000e+00> : vector<16x128xf32>
    %30 = tpu.matmul %28, %29, %cst_18 {dimension_numbers = #tpu.dot_dimension_numbers<[1], [0], [0], [1], [0, 0, 1, 1], [], []>} : vector<16x256xbf16>, vector<256x128xbf16>, vector<16x128xf32> -> vector<16x128xf32>
    %c0_19 = arith.constant 0 : index
    %c0_20 = arith.constant 0 : index
    %31 = vector.load %arg7[%c0_19, %c0_20] : memref<1x128xf32, #tpu.memory_space<vmem>>, vector<1x128xf32>
    %32 = vector.broadcast %31 : vector<1x128xf32> to vector<16x128xf32>
    %33 = arith.addf %30, %32 : vector<16x128xf32>
    %34 = vector.extract_strided_slice %33 {offsets = [0, 0], sizes = [16, 9], strides = [1, 1]} : vector<16x128xf32> to vector<16x9xf32>
    %35 = vector.extract_strided_slice %33 {offsets = [0, 9], sizes = [16, 1], strides = [1, 1]} : vector<16x128xf32> to vector<16x1xf32>
    %36 = tpu.iota {dimensions = array<i32: 0>} : vector<16x9xi32>
    %c2_i32 = arith.constant 2 : i32
    %37 = vector.broadcast %c2_i32 : i32 to vector<16x9xi32>
    %38 = arith.cmpi slt, %36, %37 : vector<16x9xi32>
    %cst_21 = arith.constant 0.000000e+00 : f32
    %39 = vector.broadcast %cst_21 : f32 to vector<16x9xf32>
    %40 = arith.select %38, %34, %39 : vector<16x9xi1>, vector<16x9xf32>
    %41 = vector.shape_cast %40 : vector<16x9xf32> to vector<1x16x9xf32>
    %cst_22 = arith.constant dense<0.000000e+00> : vector<1xf32>
    %42 = vector.multi_reduction <add>, %41, %cst_22 [1, 2] : vector<1x16x9xf32> to vector<1xf32>
    %43 = vector.shape_cast %42 : vector<1xf32> to vector<1x1x1xf32>
    %44 = vector.extract %43[0, 0, 0] : f32 from vector<1x1x1xf32>
    %cst_23 = arith.constant 0.055555556 : f32
    %45 = arith.mulf %44, %cst_23 : f32
    %46 = vector.broadcast %35 : vector<16x1xf32> to vector<16x128xf32>
    %47 = arith.addf %33, %46 : vector<16x128xf32>
    %48 = vector.broadcast %45 : f32 to vector<16x128xf32>
    %49 = arith.subf %47, %48 : vector<16x128xf32>
    %c0_24 = arith.constant 0 : index
    %c0_25 = arith.constant 0 : index
    %50 = vector.load %arg8[%c0_24, %c0_25] : memref<16x128xf32, #tpu.memory_space<vmem>>, vector<16x128xf32>
    tpu.vector_store %arg8[%c0_24, %c0_25], %49 {strides = array<i32>} : memref<16x128xf32, #tpu.memory_space<vmem>>, vector<16x128xf32>,
    return
  }
  func.func @transform_0(%arg0: i32) -> (i32, i32) {
    %c0_i32 = arith.constant 0 : i32
    %c0_i32_0 = arith.constant 0 : i32
    return %arg0, %c0_i32 : i32, i32
  }
  func.func @transform_1(%arg0: i32) -> (i32, i32) {
    %c0_i32 = arith.constant 0 : i32
    %c0_i32_0 = arith.constant 0 : i32
    %c0_i32_1 = arith.constant 0 : i32
    return %c0_i32, %c0_i32_0 : i32, i32
  }
  func.func @transform_2(%arg0: i32) -> (i32, i32) {
    %c0_i32 = arith.constant 0 : i32
    %c0_i32_0 = arith.constant 0 : i32
    %c0_i32_1 = arith.constant 0 : i32
    return %c0_i32, %c0_i32_0 : i32, i32
  }
  func.func @transform_3(%arg0: i32) -> (i32, i32) {
    %c0_i32 = arith.constant 0 : i32
    %c0_i32_0 = arith.constant 0 : i32
    %c0_i32_1 = arith.constant 0 : i32
    return %c0_i32, %c0_i32_0 : i32, i32
  }
  func.func @transform_4(%arg0: i32) -> (i32, i32) {
    %c0_i32 = arith.constant 0 : i32
    %c0_i32_0 = arith.constant 0 : i32
    %c0_i32_1 = arith.constant 0 : i32
    return %c0_i32, %c0_i32_0 : i32, i32
  }
  func.func @transform_5(%arg0: i32) -> (i32, i32) {
    %c0_i32 = arith.constant 0 : i32
    %c0_i32_0 = arith.constant 0 : i32
    %c0_i32_1 = arith.constant 0 : i32
    return %c0_i32, %c0_i32_0 : i32, i32
  }
  func.func @transform_6(%arg0: i32) -> (i32, i32) {
    %c0_i32 = arith.constant 0 : i32
    %c0_i32_0 = arith.constant 0 : i32
    %c0_i32_1 = arith.constant 0 : i32
    return %c0_i32, %c0_i32_0 : i32, i32
  }
  func.func @transform_7(%arg0: i32) -> (i32, i32) {
    %c0_i32 = arith.constant 0 : i32
    %c0_i32_0 = arith.constant 0 : i32
    return %arg0, %c0_i32 : i32, i32
  }
}

</mosaic_0001>

<llo_original>
// kernel: tpu_custom_call.1
$region0: #{tpu_custom_call.1}
  #allocation0 [shape = 'u32[]', space=smem, size = 0x4, offset = 0x4, fixed_abs, tag = 'smem constant byte address 0x4 - core index']
  #allocation1 [shape = 'u32[144,128]{1,0:T(1,128)}', space=vmem, size = 0x12000, scoped, tag = 'internal scratch']
  %s0 = inlined_call_operand.hbm [shape: bf16[16,32], index: 0, kind: input, shape index: {}]
  %s1 = inlined_call_operand.hbm [shape: bf16[32,128], index: 1, kind: input, shape index: {}]
  %s2 = inlined_call_operand.vmem [shape: f32[1,128], index: 2, kind: input, shape index: {}]
  %s3 = inlined_call_operand.hbm [shape: bf16[128,256], index: 3, kind: input, shape index: {}]
  %s4 = inlined_call_operand.vmem [shape: f32[1,256], index: 4, kind: input, shape index: {}]
  %s5 = inlined_call_operand.hbm [shape: bf16[256,128], index: 5, kind: input, shape index: {}]
  %s6 = inlined_call_operand.vmem [shape: f32[1,128], index: 6, kind: input, shape index: {}]
  %s7 = inlined_call_operand.hbm [shape: f32[16,128], index: 7, kind: output, shape index: {}]
  %s8 = sld [smem:[#allocation0]]
  $region54: #{tpu_custom_call.1} parent=0
    _
  %s10 = ssub.s32 1, %s8
  %s11 = scalar_select 0, %s10, %s8
  $region1: #{tpu_custom_call.1} parent=0
    #allocation2 [shape = 'u8[4096]{0}', space=vmem, size = 0x1000, scoped, tag = 'input window, operand 0, single buffered']
    #allocation3 [shape = 's32[1]{0}', space=sflag, size = 0x4, scoped, tag = 'scoped memory for tpu_custom_call.1']
    #allocation4 [shape = 's32[1]{0}', space=sflag, size = 0x4, scoped, tag = 'scoped memory for tpu_custom_call.1']
    #allocation5 [shape = 'u8[8192]{0}', space=vmem, size = 0x2000, scoped, tag = 'input window, operand 1, single buffered']
    #allocation6 [shape = 's32[1]{0}', space=sflag, size = 0x4, scoped, tag = 'scoped memory for tpu_custom_call.1']
    #allocation7 [shape = 'u8[65536]{0}', space=vmem, size = 0x10000, scoped, tag = 'input window, operand 3, single buffered']
    #allocation8 [shape = 'u8[65536]{0}', space=vmem, size = 0x10000, scoped, tag = 'input window, operand 5, single buffered']
    #allocation9 [shape = 's32[1]{0}', space=sflag, size = 0x4, scoped, tag = 'scoped memory for tpu_custom_call.1']
    #allocation10 [shape = 'u8[8192]{0}', space=vmem, size = 0x2000, scoped, tag = 'output window, operand 0, single buffered']
    %12 = vsyncpa [#allocation3], 0
    %13 = vsyncpa [#allocation6], 0
    %14 = vsyncpa [#allocation9], 0
    %15 = vsyncpa [#allocation4], 0
    // Predicated region
    $region2: #{tpu_custom_call.1} parent=1 // pred_check
      _
    $region3: #{tpu_custom_call.1} parent=1 // pred_check_branch
      %17 = sbr.rel (0) target = $region5
    $region4: #{tpu_custom_call.1} parent=1 // pred_region
      %s19 = ssub.s32 128, 128
      %20 = vsyncadd [#allocation3], %s19
      %s21 = sshll.u32 [#allocation2], 4
      %s22 = int_to_ptr.vmem [resolvable:$true] %s21
      %27 = dma.hbm_to_vmem [thread:$0]  %s0, 128, %s22, [#allocation3], 64, 64, 4
    $region5: #{tpu_custom_call.1} parent=1 // pred_fallthru
      _
    // Predicated region
    $region6: #{tpu_custom_call.1} parent=1 // pred_check
      _
    $region7: #{tpu_custom_call.1} parent=1 // pred_check_branch
      %29 = sbr.rel (0) target = $region9
    $region8: #{tpu_custom_call.1} parent=1 // pred_region
      %s31 = ssub.s32 256, 256
      %32 = vsyncadd [#allocation6], %s31
      %s33 = sshll.u32 [#allocation5], 4
      %s34 = int_to_ptr.vmem [resolvable:$true] %s33
      %39 = dma.hbm_to_vmem [thread:$0]  %s1, 256, %s34, [#allocation6], 64, 64, 4
    $region9: #{tpu_custom_call.1} parent=1 // pred_fallthru
      _
    // Predicated region
    $region10: #{tpu_custom_call.1} parent=1 // pred_check
      _
    $region11: #{tpu_custom_call.1} parent=1 // pred_check_branch
      %41 = sbr.rel (0) target = $region13
    $region12: #{tpu_custom_call.1} parent=1 // pred_region
      _
    $region13: #{tpu_custom_call.1} parent=1 // pred_fallthru
      _
    // Predicated region
    $region14: #{tpu_custom_call.1} parent=1 // pred_check
      _
    $region15: #{tpu_custom_call.1} parent=1 // pred_check_branch
      %43 = sbr.rel (0) target = $region17
    $region16: #{tpu_custom_call.1} parent=1 // pred_region
      %s45 = ssub.s32 2048, 2048
      %46 = vsyncadd [#allocation6], %s45
      %s47 = sshll.u32 [#allocation7], 4
      %s48 = int_to_ptr.vmem [resolvable:$true] %s47
      %53 = dma.hbm_to_vmem [thread:$0]  %s3, 2048, %s48, [#allocation6], 128, 128, 8
    $region17: #{tpu_custom_call.1} parent=1 // pred_fallthru
      _
    // Predicated region
    $region18: #{tpu_custom_call.1} parent=1 // pred_check
      _
    $region19: #{tpu_custom_call.1} parent=1 // pred_check_branch
      %55 = sbr.rel (0) target = $region21
    $region20: #{tpu_custom_call.1} parent=1 // pred_region
      _
    $region21: #{tpu_custom_call.1} parent=1 // pred_fallthru
      _
    // Predicated region
    $region22: #{tpu_custom_call.1} parent=1 // pred_check
      _
    $region23: #{tpu_custom_call.1} parent=1 // pred_check_branch
      %57 = sbr.rel (0) target = $region25
    $region24: #{tpu_custom_call.1} parent=1 // pred_region
      %s59 = ssub.s32 2048, 2048
      %60 = vsyncadd [#allocation9], %s59
      %s61 = sshll.u32 [#allocation8], 4
      %s62 = int_to_ptr.vmem [resolvable:$true] %s61
      %67 = dma.hbm_to_vmem [thread:$0]  %s5, 2048, %s62, [#allocation9], 64, 64, 4
    $region25: #{tpu_custom_call.1} parent=1 // pred_fallthru
      _
    // Predicated region
    $region26: #{tpu_custom_call.1} parent=1 // pred_check
      _
    $region27: #{tpu_custom_call.1} parent=1 // pred_check_branch
      %69 = sbr.rel (0) target = $region29
    $region28: #{tpu_custom_call.1} parent=1 // pred_region
      _
    $region29: #{tpu_custom_call.1} parent=1 // pred_fallthru
      _
    // Predicated region
    $region30: #{tpu_custom_call.1} parent=1 // pred_check
      _
    $region31: #{tpu_custom_call.1} parent=1 // pred_check_branch
      %71 = sbr.rel (0) target = $region33
    $region32: #{tpu_custom_call.1} parent=1 // pred_region
      %72 = dma.done [#allocation3], 128
    $region33: #{tpu_custom_call.1} parent=1 // pred_fallthru
      _
    // Predicated region
    $region34: #{tpu_custom_call.1} parent=1 // pred_check
      _
    $region35: #{tpu_custom_call.1} parent=1 // pred_check_branch
      %74 = sbr.rel (0) target = $region37
    $region36: #{tpu_custom_call.1} parent=1 // pred_region
      %75 = dma.done [#allocation6], 256
    $region37: #{tpu_custom_call.1} parent=1 // pred_fallthru
      _
    // Predicated region
    $region38: #{tpu_custom_call.1} parent=1 // pred_check
      _
    $region39: #{tpu_custom_call.1} parent=1 // pred_check_branch
      %77 = sbr.rel (0) target = $region41
    $region40: #{tpu_custom_call.1} parent=1 // pred_region
      %78 = dma.done [#allocation6], 2048
    $region41: #{tpu_custom_call.1} parent=1 // pred_fallthru
      _
    // Predicated region
    $region42: #{tpu_custom_call.1} parent=1 // pred_check
      _
    $region43: #{tpu_custom_call.1} parent=1 // pred_check_branch
      %80 = sbr.rel (0) target = $region45
    $region44: #{tpu_custom_call.1} parent=1 // pred_region
      %81 = dma.done [#allocation9], 2048
    $region45: #{tpu_custom_call.1} parent=1 // pred_fallthru
      _
    %v83 = vld [vmem:[#allocation2] sm:$0xf]
    %v84 = vld [vmem:[#allocation2 + $0x4] sm:$0xf]
    %v85 = vld [vmem:[#allocation5] sm:$0xf]
    %v86 = vld [vmem:[#allocation5 + $0x4] sm:$0xf]
    %v87 = vld [vmem:[#allocation5 + $0x8] sm:$0xf]
    %v88 = vld [vmem:[#allocation5 + $0xc] sm:$0xf]
    %v89 = vld [vmem:[%s2] sm:$0x1]
    %v91 = vlaneseq
    %v92 = vshrl.u32 %v91, 7
    %v93 = vsub.s32 0, %v92
    %v94 = vrot.slane %v89, %v93
    %v98 = vunpack.c.l.b16 %v83
    %v99 = vunpack.c.l.b16 %v84
    %v100 = vpack.c.b16 %v99, %v98
    %v105 = vunpack.c.l.b16 %v85
    %v106 = vunpack.c.l.b16 %v86
    %v107 = vunpack.c.l.b16 %v87
    %v108 = vunpack.c.l.b16 %v88
    %v109 = vpack.c.b16 %v106, %v105
    %v110 = vpack.c.b16 %v108, %v107
    %vm113 = vcmask 261120
    %v115 = vsel %vm113, %v100, 0
    %117 = vmatprep.subr.bf16.mxu0 0
    %118 = vmatpush1.bf16.msra.mxu0 %v109
    %119 = vmatprep.subr.bf16.mxu0 0
    %120 = vmatpush1.bf16.msra.mxu0 %v110
    %121 = vmatprep.subr.bf16.mxu0 0
    %122 = vmatpush1.bf16.msra.mxu0 0
    %123 = vmatprep.subr.bf16.mxu0 0
    %124 = vmatpush1.bf16.msra.mxu0 0
    %125 = vmatprep.subr.bf16.mxu0 0
    %126 = vmatpush1.bf16.msra.mxu0 0
    %127 = vmatprep.subr.bf16.mxu0 0
    %128 = vmatpush1.bf16.msra.mxu0 0
    %129 = vmatprep.subr.bf16.mxu0 0
    %130 = vmatpush1.bf16.msra.mxu0 0
    %131 = vmatprep.subr.bf16.mxu0 0
    %132 = vmatpush1.bf16.msra.mxu0 0
    %133 = vmatprep.subr.bf16.mxu0 0
    %134 = vmatpush1.bf16.msra.mxu0 0
    %135 = vmatprep.subr.bf16.mxu0 0
    %136 = vmatpush1.bf16.msra.mxu0 0
    %137 = vmatprep.subr.bf16.mxu0 0
    %138 = vmatpush1.bf16.msra.mxu0 0
    %139 = vmatprep.subr.bf16.mxu0 0
    %140 = vmatpush1.bf16.msra.mxu0 0
    %141 = vmatprep.subr.bf16.mxu0 0
    %142 = vmatpush1.bf16.msra.mxu0 0
    %143 = vmatprep.subr.bf16.mxu0 0
    %144 = vmatpush1.bf16.msra.mxu0 0
    %145 = vmatprep.subr.bf16.mxu0 0
    %146 = vmatpush1.bf16.msra.mxu0 0
    %147 = vmatprep.subr.bf16.mxu0 0
    %148 = vmatpush1.bf16.msra.mxu0 0
    %149 = vmatprep.mubr.bf16.mxu0 0
    %150 = vmatmul.mubr.bf16.gmra.mrb[0].mxu0 %v115
    %v151 = vpop.f32.mrb[0].mxu0
    %v152 = vadd.f32 %v94, %v151
    %v153 = vpop.f32.mrb[0].mxu0
    %v154 = vpop.f32.mrb[0].mxu0
    %v155 = vadd.f32 %v94, %v154
    %v156 = vpop.f32.mrb[0].mxu0
    %157 = vdwg.mxu0
    %v158 = vmul.f32 %v152, 0.5
    %v159 = vmul.f32 %v155, 0.5
    %v160 = vmul.f32 %v152, 0.70710677
    %v161 = vmul.f32 %v155, 0.70710677
    %v162 = verf.f32.pop %v160
    %v163 = verf.f32.pop %v161
    %v164 = vadd.f32 %v162, 1.0
    %v165 = vadd.f32 %v163, 1.0
    %v166 = vmul.f32 %v158, %v164
    %v167 = vmul.f32 %v159, %v165
    %v168 = vpack.c.bf16 %v167, %v166
    %v169 = vld [vmem:[#allocation7] sm:$0xff]
    %v170 = vld [vmem:[#allocation7 + $0x8] sm:$0xff]
    %v171 = vld [vmem:[#allocation7 + $0x10] sm:$0xff]
    %v172 = vld [vmem:[#allocation7 + $0x18] sm:$0xff]
    %v173 = vld [vmem:[#allocation7 + $0x20] sm:$0xff]
    %v174 = vld [vmem:[#allocation7 + $0x28] sm:$0xff]
    %v175 = vld [vmem:[#allocation7 + $0x30] sm:$0xff]
    %v176 = vld [vmem:[#allocation7 + $0x38] sm:$0xff]
    %v177 = vld [vmem:[#allocation7 + $0x40] sm:$0xff]
    %v178 = vld [vmem:[#allocation7 + $0x48] sm:$0xff]
    %v179 = vld [vmem:[#allocation7 + $0x50] sm:$0xff]
    %v180 = vld [vmem:[#allocation7 + $0x58] sm:$0xff]
    %v181 = vld [vmem:[#allocation7 + $0x60] sm:$0xff]
    %v182 = vld [vmem:[#allocation7 + $0x68] sm:$0xff]
    %v183 = vld [vmem:[#allocation7 + $0x70] sm:$0xff]
    %v184 = vld [vmem:[#allocation7 + $0x78] sm:$0xff]
    %v185 = vld [vmem:[%s4] sm:$0x3]
    %v187 = vlaneseq
    %v188 = vshrl.u32 %v187, 7
    %v189 = vsub.s32 0, %v188
    %v190 = vrot.slane %v185, %v189
    %v191 = vlaneseq
    %v192 = vshrl.u32 %v191, 7
    %v193 = vsub.s32 1, %v192
    %v194 = vrot.slane %v185, %v193
    %v213 = vunpack.c.l.b16 %v169
    %v214 = vunpack.c.h.b16 %v169
    %v215 = vunpack.c.l.b16 %v170
    %v216 = vunpack.c.h.b16 %v170
    %v217 = vunpack.c.l.b16 %v171
    %v218 = vunpack.c.h.b16 %v171
    %v219 = vunpack.c.l.b16 %v172
    %v220 = vunpack.c.h.b16 %v172
    %v221 = vunpack.c.l.b16 %v173
    %v222 = vunpack.c.h.b16 %v173
    %v223 = vunpack.c.l.b16 %v174
    %v224 = vunpack.c.h.b16 %v174
    %v225 = vunpack.c.l.b16 %v175
    %v226 = vunpack.c.h.b16 %v175
    %v227 = vunpack.c.l.b16 %v176
    %v228 = vunpack.c.h.b16 %v176
    %v229 = vunpack.c.l.b16 %v177
    %v230 = vunpack.c.h.b16 %v177
    %v231 = vunpack.c.l.b16 %v178
    %v232 = vunpack.c.h.b16 %v178
    %v233 = vunpack.c.l.b16 %v179
    %v234 = vunpack.c.h.b16 %v179
    %v235 = vunpack.c.l.b16 %v180
    %v236 = vunpack.c.h.b16 %v180
    %v237 = vunpack.c.l.b16 %v181
    %v238 = vunpack.c.h.b16 %v181
    %v239 = vunpack.c.l.b16 %v182
    %v240 = vunpack.c.h.b16 %v182
    %v241 = vunpack.c.l.b16 %v183
    %v242 = vunpack.c.h.b16 %v183
    %v243 = vunpack.c.l.b16 %v184
    %v244 = vunpack.c.h.b16 %v184
    %v245 = vpack.c.b16 %v215, %v213
    %v246 = vpack.c.b16 %v216, %v214
    %v247 = vpack.c.b16 %v219, %v217
    %v248 = vpack.c.b16 %v220, %v218
    %v249 = vpack.c.b16 %v223, %v221
    %v250 = vpack.c.b16 %v224, %v222
    %v251 = vpack.c.b16 %v227, %v225
    %v252 = vpack.c.b16 %v228, %v226
    %v253 = vpack.c.b16 %v231, %v229
    %v254 = vpack.c.b16 %v232, %v230
    %v255 = vpack.c.b16 %v235, %v233
    %v256 = vpack.c.b16 %v236, %v234
    %v257 = vpack.c.b16 %v239, %v237
    %v258 = vpack.c.b16 %v240, %v238
    %v259 = vpack.c.b16 %v243, %v241
    %v260 = vpack.c.b16 %v244, %v242
    %277 = vmatprep.subr.bf16.mxu0 %v246
    %278 = vmatpush1.bf16.msra.mxu0 %v245
    %279 = vmatprep.subr.bf16.mxu0 %v248
    %280 = vmatpush1.bf16.msra.mxu0 %v247
    %281 = vmatprep.subr.bf16.mxu0 %v250
    %282 = vmatpush1.bf16.msra.mxu0 %v249
    %283 = vmatprep.subr.bf16.mxu0 %v252
    %284 = vmatpush1.bf16.msra.mxu0 %v251
    %285 = vmatprep.subr.bf16.mxu0 %v254
    %286 = vmatpush1.bf16.msra.mxu0 %v253
    %287 = vmatprep.subr.bf16.mxu0 %v256
    %288 = vmatpush1.bf16.msra.mxu0 %v255
    %289 = vmatprep.subr.bf16.mxu0 %v258
    %290 = vmatpush1.bf16.msra.mxu0 %v257
    %291 = vmatprep.subr.bf16.mxu0 %v260
    %292 = vmatpush1.bf16.msra.mxu0 %v259
    %293 = vmatprep.subr.bf16.mxu0 0
    %294 = vmatpush1.bf16.msra.mxu0 0
    %295 = vmatprep.subr.bf16.mxu0 0
    %296 = vmatpush1.bf16.msra.mxu0 0
    %297 = vmatprep.subr.bf16.mxu0 0
    %298 = vmatpush1.bf16.msra.mxu0 0
    %299 = vmatprep.subr.bf16.mxu0 0
    %300 = vmatpush1.bf16.msra.mxu0 0
    %301 = vmatprep.subr.bf16.mxu0 0
    %302 = vmatpush1.bf16.msra.mxu0 0
    %303 = vmatprep.subr.bf16.mxu0 0
    %304 = vmatpush1.bf16.msra.mxu0 0
    %305 = vmatprep.subr.bf16.mxu0 0
    %306 = vmatpush1.bf16.msra.mxu0 0
    %307 = vmatprep.subr.bf16.mxu0 0
    %308 = vmatpush1.bf16.msra.mxu0 0
    %309 = vmatprep.mubr.bf16.mxu0 0
    %310 = vmatmul.mubr.bf16.gmra.mrb[0].mxu0 %v168
    %v311 = vpop.f32.mrb[0].mxu0
    %v312 = vadd.f32 %v190, %v311
    %v313 = vpop.f32.mrb[0].mxu0
    %v314 = vadd.f32 %v194, %v313
    %v315 = vpop.f32.mrb[0].mxu0
    %v316 = vadd.f32 %v190, %v315
    %v317 = vpop.f32.mrb[0].mxu0
    %v318 = vadd.f32 %v194, %v317
    %319 = vdwg.mxu0
    %v320 = vmul.f32 %v312, 0.5
    %v321 = vmul.f32 %v314, 0.5
    %v322 = vmul.f32 %v316, 0.5
    %v323 = vmul.f32 %v318, 0.5
    %v324 = vmul.f32 %v312, 0.70710677
    %v325 = vmul.f32 %v314, 0.70710677
    %v326 = vmul.f32 %v316, 0.70710677
    %v327 = vmul.f32 %v318, 0.70710677
    %v328 = verf.f32.pop %v324
    %v329 = verf.f32.pop %v325
    %v330 = verf.f32.pop %v326
    %v331 = verf.f32.pop %v327
    %v332 = vadd.f32 %v328, 1.0
    %v333 = vadd.f32 %v329, 1.0
    %v334 = vadd.f32 %v330, 1.0
    %v335 = vadd.f32 %v331, 1.0
    %v336 = vmul.f32 %v320, %v332
    %v337 = vmul.f32 %v321, %v333
    %v338 = vmul.f32 %v322, %v334
    %v339 = vmul.f32 %v323, %v335
    %v340 = vpack.c.bf16 %v338, %v336
    %v341 = vpack.c.bf16 %v339, %v337
    %v342 = vld [vmem:[#allocation8] sm:$0xf]
    %v343 = vld [vmem:[#allocation8 + $0x4] sm:$0xf]
    %v344 = vld [vmem:[#allocation8 + $0x8] sm:$0xf]
    %v345 = vld [vmem:[#allocation8 + $0xc] sm:$0xf]
    %v346 = vld [vmem:[#allocation8 + $0x10] sm:$0xf]
    %v347 = vld [vmem:[#allocation8 + $0x14] sm:$0xf]
    %v348 = vld [vmem:[#allocation8 + $0x18] sm:$0xf]
    %v349 = vld [vmem:[#allocation8 + $0x1c] sm:$0xf]
    %v350 = vld [vmem:[#allocation8 + $0x20] sm:$0xf]
    %v351 = vld [vmem:[#allocation8 + $0x24] sm:$0xf]
    %v352 = vld [vmem:[#allocation8 + $0x28] sm:$0xf]
    %v353 = vld [vmem:[#allocation8 + $0x2c] sm:$0xf]
    %v354 = vld [vmem:[#allocation8 + $0x30] sm:$0xf]
    %v355 = vld [vmem:[#allocation8 + $0x34] sm:$0xf]
    %v356 = vld [vmem:[#allocation8 + $0x38] sm:$0xf]
    %v357 = vld [vmem:[#allocation8 + $0x3c] sm:$0xf]
    %v358 = vld [vmem:[#allocation8 + $0x40] sm:$0xf]
    %v359 = vld [vmem:[#allocation8 + $0x44] sm:$0xf]
    %v360 = vld [vmem:[#allocation8 + $0x48] sm:$0xf]
    %v361 = vld [vmem:[#allocation8 + $0x4c] sm:$0xf]
    %v362 = vld [vmem:[#allocation8 + $0x50] sm:$0xf]
    %v363 = vld [vmem:[#allocation8 + $0x54] sm:$0xf]
    %v364 = vld [vmem:[#allocation8 + $0x58] sm:$0xf]
    %v365 = vld [vmem:[#allocation8 + $0x5c] sm:$0xf]
    %v366 = vld [vmem:[#allocation8 + $0x60] sm:$0xf]
    %v367 = vld [vmem:[#allocation8 + $0x64] sm:$0xf]
    %v368 = vld [vmem:[#allocation8 + $0x68] sm:$0xf]
    %v369 = vld [vmem:[#allocation8 + $0x6c] sm:$0xf]
    %v370 = vld [vmem:[#allocation8 + $0x70] sm:$0xf]
    %v371 = vld [vmem:[#allocation8 + $0x74] sm:$0xf]
    %v372 = vld [vmem:[#allocation8 + $0x78] sm:$0xf]
    %v373 = vld [vmem:[#allocation8 + $0x7c] sm:$0xf]
    %v374 = vld [vmem:[%s6] sm:$0x1]
    %v376 = vlaneseq
    %v377 = vshrl.u32 %v376, 7
    %v378 = vsub.s32 0, %v377
    %v379 = vrot.slane %v374, %v378
    %v413 = vunpack.c.l.b16 %v342
    %v414 = vunpack.c.l.b16 %v343
    %v415 = vunpack.c.l.b16 %v344
    %v416 = vunpack.c.l.b16 %v345
    %v417 = vunpack.c.l.b16 %v346
    %v418 = vunpack.c.l.b16 %v347
    %v419 = vunpack.c.l.b16 %v348
    %v420 = vunpack.c.l.b16 %v349
    %v421 = vunpack.c.l.b16 %v350
    %v422 = vunpack.c.l.b16 %v351
    %v423 = vunpack.c.l.b16 %v352
    %v424 = vunpack.c.l.b16 %v353
    %v425 = vunpack.c.l.b16 %v354
    %v426 = vunpack.c.l.b16 %v355
    %v427 = vunpack.c.l.b16 %v356
    %v428 = vunpack.c.l.b16 %v357
    %v429 = vunpack.c.l.b16 %v358
    %v430 = vunpack.c.l.b16 %v359
    %v431 = vunpack.c.l.b16 %v360
    %v432 = vunpack.c.l.b16 %v361
    %v433 = vunpack.c.l.b16 %v362
    %v434 = vunpack.c.l.b16 %v363
    %v435 = vunpack.c.l.b16 %v364
    %v436 = vunpack.c.l.b16 %v365
    %v437 = vunpack.c.l.b16 %v366
    %v438 = vunpack.c.l.b16 %v367
    %v439 = vunpack.c.l.b16 %v368
    %v440 = vunpack.c.l.b16 %v369
    %v441 = vunpack.c.l.b16 %v370
    %v442 = vunpack.c.l.b16 %v371
    %v443 = vunpack.c.l.b16 %v372
    %v444 = vunpack.c.l.b16 %v373
    %v445 = vpack.c.b16 %v414, %v413
    %v446 = vpack.c.b16 %v416, %v415
    %v447 = vpack.c.b16 %v418, %v417
    %v448 = vpack.c.b16 %v420, %v419
    %v449 = vpack.c.b16 %v422, %v421
    %v450 = vpack.c.b16 %v424, %v423
    %v451 = vpack.c.b16 %v426, %v425
    %v452 = vpack.c.b16 %v428, %v427
    %v453 = vpack.c.b16 %v430, %v429
    %v454 = vpack.c.b16 %v432, %v431
    %v455 = vpack.c.b16 %v434, %v433
    %v456 = vpack.c.b16 %v436, %v435
    %v457 = vpack.c.b16 %v438, %v437
    %v458 = vpack.c.b16 %v440, %v439
    %v459 = vpack.c.b16 %v442, %v441
    %v460 = vpack.c.b16 %v444, %v443
    %477 = vmatprep.subr.bf16.mxu0 0
    %478 = vmatpush1.bf16.msra.mxu0 %v445
    %479 = vmatprep.subr.bf16.mxu0 0
    %480 = vmatpush1.bf16.msra.mxu0 %v446
    %481 = vmatprep.subr.bf16.mxu0 0
    %482 = vmatpush1.bf16.msra.mxu0 %v447
    %483 = vmatprep.subr.bf16.mxu0 0
    %484 = vmatpush1.bf16.msra.mxu0 %v448
    %485 = vmatprep.subr.bf16.mxu0 0
    %486 = vmatpush1.bf16.msra.mxu0 %v449
    %487 = vmatprep.subr.bf16.mxu0 0
    %488 = vmatpush1.bf16.msra.mxu0 %v450
    %489 = vmatprep.subr.bf16.mxu0 0
    %490 = vmatpush1.bf16.msra.mxu0 %v451
    %491 = vmatprep.subr.bf16.mxu0 0
    %492 = vmatpush1.bf16.msra.mxu0 %v452
    %493 = vmatprep.subr.bf16.mxu0 0
    %494 = vmatpush1.bf16.msra.mxu0 %v453
    %495 = vmatprep.subr.bf16.mxu0 0
    %496 = vmatpush1.bf16.msra.mxu0 %v454
    %497 = vmatprep.subr.bf16.mxu0 0
    %498 = vmatpush1.bf16.msra.mxu0 %v455
    %499 = vmatprep.subr.bf16.mxu0 0
    %500 = vmatpush1.bf16.msra.mxu0 %v456
    %501 = vmatprep.subr.bf16.mxu0 0
    %502 = vmatpush1.bf16.msra.mxu0 %v457
    %503 = vmatprep.subr.bf16.mxu0 0
    %504 = vmatpush1.bf16.msra.mxu0 %v458
    %505 = vmatprep.subr.bf16.mxu0 0
    %506 = vmatpush1.bf16.msra.mxu0 %v459
    %507 = vmatprep.subr.bf16.mxu0 0
    %508 = vmatpush1.bf16.msra.mxu0 %v460
    %509 = vmatprep.mubr.bf16.mxu0 %v341
    %510 = vmatmul.mubr.bf16.gmra.mrb[0].mxu0 %v340
    %v511 = vpop.f32.mrb[0].mxu0
    %v512 = vadd.f32 %v379, %v511
    %v513 = vpop.f32.mrb[0].mxu0
    %v514 = vpop.f32.mrb[0].mxu0
    %v515 = vadd.f32 %v379, %v514
    %v516 = vpop.f32.mrb[0].mxu0
    %517 = vdwg.mxu0
    %v518 = vlaneseq
    %v519 = vshrl.u32 %v518, 7
    %v520 = vadd.s32 %v519, 8
    %vm521 = vcmp.lt.s32.totalorder %v519, 2
    %vm522 = vcmp.lt.s32.totalorder %v520, 2
    %v523 = vsel %vm521, %v512, 0.0
    %v524 = vsel %vm522, %v515, 0.0
    %vm525 = vcmask 72704
    %v526 = vsel %vm525, %v523, 0.0
    %v527 = vsel %vm525, %v524, 0.0
    %v528 = vadd.f32 %v526, %v527
    %529 = vadd.xlane.f32.xlu0 %v528
    %v530 = vpop.xlane.xlu0 %529
    %v531 = vrot.slane %v530, 4
    %v532 = vadd.f32 %v530, %v531
    %v533 = vrot.slane %v532, 2
    %v534 = vadd.f32 %v532, %v533
    %v535 = vrot.slane %v534, 1
    %v536 = vadd.f32 %v534, %v535
    %s537 = vtos %v536
    %s538 = smul.f32 %s537, 0.055555556
    %540 = vset.pattern.permute.xlu0 9
    %541 = vperm.xlu0 %540, %v512
    %v542 = vpop.permute.xlu0 %541
    %545 = vset.pattern.permute.xlu0 9
    %546 = vperm.xlu0 %545, %v515
    %v547 = vpop.permute.xlu0 %546
    %v549 = vadd.f32 %v512, %v542
    %v550 = vadd.f32 %v515, %v547
    %v551 = vstv %s538
    %v552 = vsub.f32 %v549, %v551
    %v553 = vsub.f32 %v550, %v551
    %554 = vst [vmem:[#allocation10] sm:$0xff] %v552
    %555 = vst [vmem:[#allocation10 + $0x8] sm:$0xff] %v553
    // Predicated region
    $region46: #{tpu_custom_call.1} parent=1 // pred_check
      _
    $region47: #{tpu_custom_call.1} parent=1 // pred_check_branch
      %557 = sbr.rel (0) target = $region49
    $region48: #{tpu_custom_call.1} parent=1 // pred_region
      %s559 = ssub.s32 256, 256
      %560 = vsyncadd [#allocation4], %s559
      %s561 = sshll.u32 [#allocation10], 4
      %s562 = int_to_ptr.vmem [resolvable:$true] %s561
      %567 = dma.vmem_to_hbm [thread:$0]  %s562, 256, %s7, [#allocation4], 128, 128, 8
    $region49: #{tpu_custom_call.1} parent=1 // pred_fallthru
      _
    // Predicated region
    $region50: #{tpu_custom_call.1} parent=1 // pred_check
      _
    $region51: #{tpu_custom_call.1} parent=1 // pred_check_branch
      %569 = sbr.rel (0) target = $region53
    $region52: #{tpu_custom_call.1} parent=1 // pred_region
      %570 = dma.done [#allocation4], 256
    $region53: #{tpu_custom_call.1} parent=1 // pred_fallthru
      _
    %571 = vsyncpa [#allocation3], 1
    %572 = vsyncpa [#allocation6], 1
    %573 = vsyncpa [#allocation9], 1
    %574 = vsyncpa [#allocation4], 1

</llo_original>
